<compile_context>
chip_gen: v7x
topology: tpu7x:2x2x1
jax: 0.10.0
libtpu: 0.0.40
codegen_flags: <defaults>
</compile_context>

<pallas_src>
import functools

import jax
import jax.numpy as jnp
from jax.experimental import pallas as pl
from jax.experimental.pallas import tpu as pltpu

EPS = 1e-8


def resblock_kernel(x_ref,
                    st_ref, w1t_ref, b1_ref, w2t_ref, b2_ref,     # temporal branch
                    sct_ref, w3_ref, b3_ref, w4_ref, b4_ref,      # channel MLP branch
                    o_ref, *, inv_dl, true_l, matmul_dtype):
    f32 = jnp.float32
    x = x_ref[...].astype(f32)                               # (bt, D, Lp)
    bt, d, lp = x.shape

    # ---- temporal branch: native (D, L) layout, batch folded into the MXU M dim ----
    ssq1 = jnp.sum(jnp.sum(x * x, axis=2, keepdims=True), axis=1, keepdims=True)
    inv1 = jax.lax.rsqrt(ssq1 * inv_dl + EPS)                # (bt, 1, 1) per-sample RMS
    n1 = (st_ref[...] * x * inv1).reshape(bt * d, lp)        # RMSNorm, (bt*D, Lp)
    h = jnp.dot(n1.astype(matmul_dtype), w1t_ref[...],
                preferred_element_type=f32) + b1_ref[...]    # (bt*D, dm)
    h = jnp.maximum(h, 0.0)
    t = jnp.dot(h.astype(matmul_dtype), w2t_ref[...],
                preferred_element_type=f32) + b2_ref[...]    # (bt*D, Lp)
    x2 = x + t.reshape(bt, d, lp)                            # residual, (bt, D, Lp)

    # ---- channel MLP branch ----
    ssq2 = jnp.sum(jnp.sum(x2 * x2, axis=2, keepdims=True), axis=1, keepdims=True)
    inv2 = jax.lax.rsqrt(ssq2 * inv_dl + EPS)                # (bt, 1, 1)
    n2 = sct_ref[...] * x2 * inv2                            # (bt, D, Lp) f32

    d4 = w3_ref.shape[0]
    if d <= 32:
        # Small enc_in (default D=8, d4=2): pure VPU path — broadcast-multiply + sublane
        # reduce (d4*D FMAs per lane element).  No MXU tiny-matmul, no per-batch weight
        # copies, stays lane-dense in (bt, D, Lp).
        w3v = w3_ref[...].astype(f32)                        # (d4, D)
        w4v = w4_ref[...].astype(f32)                        # (D, d4)
        h2 = jnp.sum(w3v[None, :, :, None] * n2[:, None, :, :], axis=2)   # (bt, d4, Lp)
        h2 = jnp.maximum(h2 + b3_ref[...], 0.0)
        c = jnp.sum(w4v[None, :, :, None] * h2[:, None, :, :], axis=2)    # (bt, D, Lp)
        c = c + b4_ref[...]
    else:
        # TODO(synk): large enc_in would benefit from a dedicated single 2-D MXU
        #             formulation (w3 @ (D, bt*Lp)); batched einsum kept as fallback.
        n2m = n2.astype(matmul_dtype)
        w3b = jnp.broadcast_to(w3_ref[...], (bt, d4, d))
        h2 = jnp.einsum('bkd,bdl->bkl', w3b, n2m,
                        preferred_element_type=f32) + b3_ref[...]
        h2 = jnp.maximum(h2, 0.0).astype(matmul_dtype)
        w4b = jnp.broadcast_to(w4_ref[...], (bt, d, d4))
        c = jnp.einsum('bdk,bkl->bdl', w4b, h2,
                       preferred_element_type=f32) + b4_ref[...]

    out = x2 + c                                             # second residual
    if lp != true_l:
        # keep padded lanes exactly zero so padded activations can be chained safely
        lane = jax.lax.broadcasted_iota(jnp.int32, (bt, d, lp), 2)
        out = jnp.where(lane < true_l, out, 0.0)
    o_ref[...] = out.astype(o_ref.dtype)


def _num_tensorcores():
    """Best-effort: 2 TensorCores per chip on v7x, else 1."""
    try:
        kind = (jax.devices()[0].device_kind or "").lower()
        if "v7" in kind:
            return 2
    except Exception:
        pass
    return 1


def _pick_block_batch(B, D, Lp, d_model, d4, *, num_tc=1, budget_bytes=24 << 20):
    """Largest batch tile dividing B that fits a generation-aware VMEM budget.
    Accounts for double-buffered in/out blocks plus the live f32 temporaries.  The
    '>= 2 grid steps' rule is applied only when 2 TensorCores exist (megacore split);
    on single-TC chips the whole batch goes into one block to fill the MXU M dim."""
    per_sample = 4 * (12 * D * Lp + 2 * D * d_model + max(d4, 8) * Lp)
    cap = max(1, budget_bytes // max(per_sample, 1))
    if num_tc >= 2 and B > 1:
        cap = min(cap, max(1, B // 2))
    bt = int(min(B, cap))
    while B % bt != 0:
        bt -= 1
    return bt


def _prep_consts(params, L, Lp, matmul_dtype):
    """One-time layout prep: transpose/pad/cast weights so the kernel is transpose-
    and cast-free.  Padded rows/cols are zero so padding is numerically exact."""
    scale_t, w1, b1, w2, b2, scale_c, w3, b3, w4, b4 = params
    D = scale_t.shape[0]
    d4 = w3.shape[0]
    pad = Lp - L

    def pad_last(a):
        return jnp.pad(a, [(0, 0)] * (a.ndim - 1) + [(0, pad)]) if pad else a

    b1 = b1.reshape(1, -1)
    b2 = b2.reshape(1, -1)
    chan_dtype = matmul_dtype if D > 32 else jnp.float32     # VPU path stays f32

    st = pad_last(scale_t).astype(jnp.float32)                       # (D, Lp)
    w1t = w1.T
    if pad:
        w1t = jnp.pad(w1t, ((0, pad), (0, 0)))                       # zero K rows
    consts = (
        st,
        w1t.astype(matmul_dtype), b1.astype(jnp.float32),            # (Lp, dm), (1, dm)
        pad_last(w2.T).astype(matmul_dtype),                         # (dm, Lp) zero pad cols
        pad_last(b2).astype(jnp.float32),                            # (1, Lp)  zero pad cols
        pad_last(scale_c.T).astype(jnp.float32),                     # (D, Lp)
        w3.astype(chan_dtype), b3.reshape(d4, 1).astype(jnp.float32),
        w4.astype(chan_dtype), b4.reshape(D, 1).astype(jnp.float32),
    )
    return consts


def resblock_forward_bdl(x_bdl, params, *, block_batch=None, matmul_dtype=jnp.float32,
                         pad_seq=True, vmem_limit_bytes=None):
    """Transpose-free entry point: x_bdl is (B, enc_in, seq_len) -> (B, enc_in, seq_len).
    Use this when stacking ResBlocks so the layout swap happens once at model edges."""
    B, D, L = x_bdl.shape
    d_model = params[1].shape[0]
    d4 = params[6].shape[0]

    Lp = ((L + 127) // 128) * 128 if pad_seq else L          # lane-dense last dim
    x_pad = jnp.pad(x_bdl, ((0, 0), (0, 0), (0, Lp - L))) if Lp != L else x_bdl
    consts = _prep_consts(params, L, Lp, matmul_dtype)

    bt = block_batch if block_batch is not None else _pick_block_batch(
        B, D, Lp, d_model, d4, num_tc=_num_tensorcores())
    assert B % bt == 0, (B, bt)

    kernel = functools.partial(resblock_kernel, inv_dl=1.0 / (D * L), true_l=L,
                               matmul_dtype=matmul_dtype)

    def const_spec(a):
        nd = a.ndim
        return pl.BlockSpec(a.shape, lambda i, _nd=nd: (0,) * _nd)

    itemsize = jnp.dtype(x_bdl.dtype).itemsize
    const_bytes = sum(int(a.size) * jnp.dtype(a.dtype).itemsize for a in consts)
    cost = pl.CostEstimate(
        flops=int(4 * B * D * Lp * d_model + 4 * B * D * d4 * Lp + 12 * B * D * Lp),
        transcendentals=int(2 * B),
        bytes_accessed=int(2 * B * D * Lp * itemsize + const_bytes))

    if vmem_limit_bytes is None:
        est = 4 * bt * D * Lp * 16 + 2 * const_bytes + 8 * bt * D * d_model
        vmem_limit_bytes = int(min(max(2 * est, 16 << 20), 48 << 20))  # <= v7x 64 MiB

    out_pad = pl.pallas_call(
        kernel,
        grid=(B // bt,),
        in_specs=[pl.BlockSpec((bt, D, Lp), lambda i: (i, 0, 0))]
                 + [const_spec(a) for a in consts],
        out_specs=pl.BlockSpec((bt, D, Lp), lambda i: (i, 0, 0)),
        out_shape=jax.ShapeDtypeStruct((B, D, Lp), x_bdl.dtype),
        compiler_params=pltpu.CompilerParams(
            dimension_semantics=("parallel",),
            vmem_limit_bytes=vmem_limit_bytes),
        cost_estimate=cost,
    )(x_pad, *consts)
    return out_pad[:, :, :L] if Lp != L else out_pad


def resblock_forward(x, params, **kwargs):
    """x: (B, seq_len, enc_in) -> (B, seq_len, enc_in). params in PyTorch layouts."""
    xt = jnp.swapaxes(x, 1, 2)                               # (B, D, L)
    out = resblock_forward_bdl(xt, params, **kwargs)
    return jnp.swapaxes(out, 1, 2)


def resblock_reference(x, params):
    """Pure-JAX reference mirroring the PyTorch forward (eval mode)."""
    scale_t, w1, b1, w2, b2, scale_c, w3, b3, w4, b4 = params
    xt = jnp.swapaxes(x, 1, 2)                                       # (B, D, L)
    rms1 = jnp.sqrt(jnp.mean(xt ** 2, axis=(-2, -1), keepdims=True) + EPS)
    n1 = scale_t * xt / rms1
    h = jax.nn.relu(n1 @ w1.T + b1)
    t = h @ w2.T + b2
    x2 = x + jnp.swapaxes(t, 1, 2)
    rms2 = jnp.sqrt(jnp.mean(x2 ** 2, axis=(-2, -1), keepdims=True) + EPS)
    n2 = scale_c * x2 / rms2
    h2 = jax.nn.relu(n2 @ w3.T + b3)
    c = h2 @ w4.T + b4
    return x2 + c


def init_params(key, seq_len, enc_in, d_model):
    ks = jax.random.split(key, 8)
    d4 = enc_in // 4

    def lin(k, fan_in, shape):
        bound = 1.0 / jnp.sqrt(fan_in)
        return jax.random.uniform(k, shape, jnp.float32, -bound, bound)

    scale_t = jnp.ones((enc_in, seq_len), jnp.float32)        # RMSNorm([enc_in, seq_len])
    w1 = lin(ks[0], seq_len, (d_model, seq_len))              # Linear(seq_len, d_model)
    b1 = lin(ks[1], seq_len, (1, d_model))
    w2 = lin(ks[2], d_model, (seq_len, d_model))              # Linear(d_model, seq_len)
    b2 = lin(ks[3], d_model, (1, seq_len))
    scale_c = jnp.ones((seq_len, enc_in), jnp.float32)        # RMSNorm([seq_len, enc_in])
    w3 = lin(ks[4], enc_in, (d4, enc_in))                     # Linear(enc_in, enc_in//4)
    b3 = lin(ks[5], enc_in, (1, d4))
    w4 = lin(ks[6], d4, (enc_in, d4))                         # Linear(enc_in//4, enc_in)
    b4 = lin(ks[7], d4, (1, enc_in))
    return (scale_t, w1, b1, w2, b2, scale_c, w3, b3, w4, b4)


if __name__ == "__main__":
    B, seq_len, enc_in, d_model = 4, 96, 8, 32   # module default seq_len=96

    key = jax.random.PRNGKey(0)
    k_x, k_p = jax.random.split(key)
    x = jax.random.normal(k_x, (B, seq_len, enc_in), jnp.float32)
    params = init_params(k_p, seq_len, enc_in, d_model)

    out = jax.block_until_ready(resblock_forward(x, params))
    ref = resblock_reference(x, params)

    assert out.shape == (B, seq_len, enc_in)
    max_diff = float(jnp.max(jnp.abs(out - ref)))
    assert jnp.allclose(out, ref, atol=1e-2, rtol=1e-2), f"max abs diff {max_diff}"

    print("KERNEL_OK")
</pallas_src>

<mosaic_0001>
module attributes {stable_mosaic.version = 11 : i64} {
  func.func @resblock_kernel(%arg0: i32, %arg1: memref<4x8x128xf32, #tpu.memory_space<vmem>>, %arg2: memref<8x128xf32, #tpu.memory_space<vmem>>, %arg3: memref<128x32xf32, #tpu.memory_space<vmem>>, %arg4: memref<1x32xf32, #tpu.memory_space<vmem>>, %arg5: memref<32x128xf32, #tpu.memory_space<vmem>>, %arg6: memref<1x128xf32, #tpu.memory_space<vmem>>, %arg7: memref<8x128xf32, #tpu.memory_space<vmem>>, %arg8: memref<2x8xf32, #tpu.memory_space<vmem>>, %arg9: memref<2x1xf32, #tpu.memory_space<vmem>>, %arg10: memref<8x2xf32, #tpu.memory_space<vmem>>, %arg11: memref<8x1xf32, #tpu.memory_space<vmem>>, %arg12: memref<4x8x128xf32, #tpu.memory_space<vmem>>) attributes {dimension_semantics = [#tpu.dimension_semantics<parallel>], iteration_bounds = array<i64: 1>, scalar_prefetch = 0 : i64, scratch_operands = 0 : i64, tpu.core_type = #tpu.core_type<tc>, window_params = [{transform_indices = @transform_0, window_bounds = array<i64: 4, 8, 128>}, {pipeline_mode = #tpu.pipeline_mode<synchronous>, transform_indices = @transform_1, window_bounds = array<i64: 8, 128>}, {pipeline_mode = #tpu.pipeline_mode<synchronous>, transform_indices = @transform_2, window_bounds = array<i64: 128, 32>}, {pipeline_mode = #tpu.pipeline_mode<synchronous>, transform_indices = @transform_3, window_bounds = array<i64: 1, 32>}, {pipeline_mode = #tpu.pipeline_mode<synchronous>, transform_indices = @transform_4, window_bounds = array<i64: 32, 128>}, {pipeline_mode = #tpu.pipeline_mode<synchronous>, transform_indices = @transform_5, window_bounds = array<i64: 1, 128>}, {pipeline_mode = #tpu.pipeline_mode<synchronous>, transform_indices = @transform_6, window_bounds = array<i64: 8, 128>}, {pipeline_mode = #tpu.pipeline_mode<synchronous>, transform_indices = @transform_7, window_bounds = array<i64: 2, 8>}, {pipeline_mode = #tpu.pipeline_mode<synchronous>, transform_indices = @transform_8, window_bounds = array<i64: 2, 1>}, {pipeline_mode = #tpu.pipeline_mode<synchronous>, transform_indices = @transform_9, window_bounds = array<i64: 8, 2>}, {pipeline_mode = #tpu.pipeline_mode<synchronous>, transform_indices = @transform_10, window_bounds = array<i64: 8, 1>}, {transform_indices = @transform_11, window_bounds = array<i64: 4, 8, 128>}]} {
    %c0 = arith.constant 0 : index
    %c0_0 = arith.constant 0 : index
    %c0_1 = arith.constant 0 : index
    %0 = vector.load %arg1[%c0, %c0_0, %c0_1] : memref<4x8x128xf32, #tpu.memory_space<vmem>>, vector<4x8x128xf32>
    %1 = arith.mulf %0, %0 : vector<4x8x128xf32>
    %cst = arith.constant dense<0.000000e+00> : vector<4x8xf32>
    %2 = vector.multi_reduction <add>, %1, %cst [2] : vector<4x8x128xf32> to vector<4x8xf32>
    %3 = vector.shape_cast %2 : vector<4x8xf32> to vector<4x8x1xf32>
    %cst_2 = arith.constant dense<0.000000e+00> : vector<4x1xf32>
    %4 = vector.multi_reduction <add>, %3, %cst_2 [1] : vector<4x8x1xf32> to vector<4x1xf32>
    %5 = vector.shape_cast %4 : vector<4x1xf32> to vector<4x1x1xf32>
    %cst_3 = arith.constant 0.00130208337 : f32
    %6 = vector.broadcast %cst_3 : f32 to vector<4x1x1xf32>
    %7 = arith.mulf %5, %6 : vector<4x1x1xf32>
    %cst_4 = arith.constant 9.99999993E-9 : f32
    %8 = vector.broadcast %cst_4 : f32 to vector<4x1x1xf32>
    %9 = arith.addf %7, %8 : vector<4x1x1xf32>
    %10 = math.rsqrt %9 : vector<4x1x1xf32>
    %c0_5 = arith.constant 0 : index
    %c0_6 = arith.constant 0 : index
    %11 = vector.load %arg2[%c0_5, %c0_6] : memref<8x128xf32, #tpu.memory_space<vmem>>, vector<8x128xf32>
    %12 = vector.shape_cast %11 : vector<8x128xf32> to vector<1x8x128xf32>
    %13 = vector.broadcast %12 : vector<1x8x128xf32> to vector<4x8x128xf32>
    %14 = arith.mulf %13, %0 : vector<4x8x128xf32>
    %15 = vector.broadcast %10 : vector<4x1x1xf32> to vector<4x8x128xf32>
    %16 = arith.mulf %14, %15 : vector<4x8x128xf32>
    %17 = vector.shape_cast %16 : vector<4x8x128xf32> to vector<32x128xf32>
    %c0_7 = arith.constant 0 : index
    %c0_8 = arith.constant 0 : index
    %18 = vector.load %arg3[%c0_7, %c0_8] : memref<128x32xf32, #tpu.memory_space<vmem>>, vector<128x32xf32>
    %cst_9 = arith.constant dense<0.000000e+00> : vector<32x32xf32>
    %19 = tpu.matmul %17, %18, %cst_9 {dimension_numbers = #tpu.dot_dimension_numbers<[1], [0], [0], [1], [0, 0, 1, 1], [], []>} : vector<32x128xf32>, vector<128x32xf32>, vector<32x32xf32> -> vector<32x32xf32>
    %c0_10 = arith.constant 0 : index
    %c0_11 = arith.constant 0 : index
    %20 = vector.load %arg4[%c0_10, %c0_11] : memref<1x32xf32, #tpu.memory_space<vmem>>, vector<1x32xf32>
    %21 = vector.broadcast %20 : vector<1x32xf32> to vector<32x32xf32>
    %22 = arith.addf %19, %21 : vector<32x32xf32>
    %cst_12 = arith.constant 0.000000e+00 : f32
    %23 = vector.broadcast %cst_12 : f32 to vector<32x32xf32>
    %24 = arith.maximumf %22, %23 : vector<32x32xf32>
    %c0_13 = arith.constant 0 : index
    %c0_14 = arith.constant 0 : index
    %25 = vector.load %arg5[%c0_13, %c0_14] : memref<32x128xf32, #tpu.memory_space<vmem>>, vector<32x128xf32>
    %cst_15 = arith.constant dense<0.000000e+00> : vector<32x128xf32>
    %26 = tpu.matmul %24, %25, %cst_15 {dimension_numbers = #tpu.dot_dimension_numbers<[1], [0], [0], [1], [0, 0, 1, 1], [], []>} : vector<32x32xf32>, vector<32x128xf32>, vector<32x128xf32> -> vector<32x128xf32>
    %c0_16 = arith.constant 0 : index
    %c0_17 = arith.constant 0 : index
    %27 = vector.load %arg6[%c0_16, %c0_17] : memref<1x128xf32, #tpu.memory_space<vmem>>, vector<1x128xf32>
    %28 = vector.broadcast %27 : vector<1x128xf32> to vector<32x128xf32>
    %29 = arith.addf %26, %28 : vector<32x128xf32>
    %30 = vector.shape_cast %29 : vector<32x128xf32> to vector<4x8x128xf32>
    %31 = arith.addf %0, %30 : vector<4x8x128xf32>
    %32 = arith.mulf %31, %31 : vector<4x8x128xf32>
    %cst_18 = arith.constant dense<0.000000e+00> : vector<4x8xf32>
    %33 = vector.multi_reduction <add>, %32, %cst_18 [2] : vector<4x8x128xf32> to vector<4x8xf32>
    %34 = vector.shape_cast %33 : vector<4x8xf32> to vector<4x8x1xf32>
    %cst_19 = arith.constant dense<0.000000e+00> : vector<4x1xf32>
    %35 = vector.multi_reduction <add>, %34, %cst_19 [1] : vector<4x8x1xf32> to vector<4x1xf32>
    %36 = vector.shape_cast %35 : vector<4x1xf32> to vector<4x1x1xf32>
    %cst_20 = arith.constant 0.00130208337 : f32
    %37 = vector.broadcast %cst_20 : f32 to vector<4x1x1xf32>
    %38 = arith.mulf %36, %37 : vector<4x1x1xf32>
    %cst_21 = arith.constant 9.99999993E-9 : f32
    %39 = vector.broadcast %cst_21 : f32 to vector<4x1x1xf32>
    %40 = arith.addf %38, %39 : vector<4x1x1xf32>
    %41 = math.rsqrt %40 : vector<4x1x1xf32>
    %c0_22 = arith.constant 0 : index
    %c0_23 = arith.constant 0 : index
    %42 = vector.load %arg7[%c0_22, %c0_23] : memref<8x128xf32, #tpu.memory_space<vmem>>, vector<8x128xf32>
    %43 = vector.shape_cast %42 : vector<8x128xf32> to vector<1x8x128xf32>
    %44 = vector.broadcast %43 : vector<1x8x128xf32> to vector<4x8x128xf32>
    %45 = arith.mulf %44, %31 : vector<4x8x128xf32>
    %46 = vector.broadcast %41 : vector<4x1x1xf32> to vector<4x8x128xf32>
    %47 = arith.mulf %45, %46 : vector<4x8x128xf32>
    %c0_24 = arith.constant 0 : index
    %c0_25 = arith.constant 0 : index
    %48 = vector.load %arg8[%c0_24, %c0_25] : memref<2x8xf32, #tpu.memory_space<vmem>>, vector<2x8xf32>
    %c0_26 = arith.constant 0 : index
    %c0_27 = arith.constant 0 : index
    %49 = vector.load %arg10[%c0_26, %c0_27] : memref<8x2xf32, #tpu.memory_space<vmem>>, vector<8x2xf32>
    %50 = vector.shape_cast %48 : vector<2x8xf32> to vector<1x2x8x1xf32>
    %51 = vector.shape_cast %47 : vector<4x8x128xf32> to vector<4x1x8x128xf32>
    %52 = vector.broadcast %50 : vector<1x2x8x1xf32> to vector<4x2x8x128xf32>
    %53 = vector.broadcast %51 : vector<4x1x8x128xf32> to vector<4x2x8x128xf32>
    %54 = arith.mulf %52, %53 : vector<4x2x8x128xf32>
    %cst_28 = arith.constant dense<0.000000e+00> : vector<4x2x128xf32>
    %55 = vector.multi_reduction <add>, %54, %cst_28 [2] : vector<4x2x8x128xf32> to vector<4x2x128xf32>
    %c0_29 = arith.constant 0 : index
    %c0_30 = arith.constant 0 : index
    %56 = vector.load %arg9[%c0_29, %c0_30] : memref<2x1xf32, #tpu.memory_space<vmem>>, vector<2x1xf32>
    %57 = vector.shape_cast %56 : vector<2x1xf32> to vector<1x2x1xf32>
    %58 = vector.broadcast %57 : vector<1x2x1xf32> to vector<4x2x128xf32>
    %59 = arith.addf %55, %58 : vector<4x2x128xf32>
    %cst_31 = arith.constant 0.000000e+00 : f32
    %60 = vector.broadcast %cst_31 : f32 to vector<4x2x128xf32>
    %61 = arith.maximumf %59, %60 : vector<4x2x128xf32>
    %62 = vector.shape_cast %49 : vector<8x2xf32> to vector<1x8x2x1xf32>
    %63 = vector.shape_cast %61 : vector<4x2x128xf32> to vector<4x1x2x128xf32>
    %64 = vector.broadcast %62 : vector<1x8x2x1xf32> to vector<4x8x2x128xf32>
    %65 = vector.broadcast %63 : vector<4x1x2x128xf32> to vector<4x8x2x128xf32>
    %66 = arith.mulf %64, %65 : vector<4x8x2x128xf32>
    %cst_32 = arith.constant dense<0.000000e+00> : vector<4x8x128xf32>
    %67 = vector.multi_reduction <add>, %66, %cst_32 [2] : vector<4x8x2x128xf32> to vector<4x8x128xf32>
    %c0_33 = arith.constant 0 : index
    %c0_34 = arith.constant 0 : index
    %68 = vector.load %arg11[%c0_33, %c0_34] : memref<8x1xf32, #tpu.memory_space<vmem>>, vector<8x1xf32>
    %69 = vector.shape_cast %68 : vector<8x1xf32> to vector<1x8x1xf32>
    %70 = vector.broadcast %69 : vector<1x8x1xf32> to vector<4x8x128xf32>
    %71 = arith.addf %67, %70 : vector<4x8x128xf32>
    %72 = arith.addf %31, %71 : vector<4x8x128xf32>
    %73 = tpu.iota {dimensions = array<i32: 2>} : vector<4x8x128xi32>
    %c96_i32 = arith.constant 96 : i32
    %74 = vector.broadcast %c96_i32 : i32 to vector<4x8x128xi32>
    %75 = arith.cmpi slt, %73, %74 : vector<4x8x128xi32>
    %cst_35 = arith.constant 0.000000e+00 : f32
    %76 = vector.broadcast %cst_35 : f32 to vector<4x8x128xf32>
    %77 = arith.select %75, %72, %76 : vector<4x8x128xi1>, vector<4x8x128xf32>
    %c0_36 = arith.constant 0 : index
    %c0_37 = arith.constant 0 : index
    %c0_38 = arith.constant 0 : index
    %78 = vector.load %arg12[%c0_36, %c0_37, %c0_38] : memref<4x8x128xf32, #tpu.memory_space<vmem>>, vector<4x8x128xf32>
    tpu.vector_store %arg12[%c0_36, %c0_37, %c0_38], %77 {strides = array<i32>} : memref<4x8x128xf32, #tpu.memory_space<vmem>>, vector<4x8x128xf32>,
    return
  }
  func.func @transform_0(%arg0: i32) -> (i32, i32, i32) {
    %c0_i32 = arith.constant 0 : i32
    %c0_i32_0 = arith.constant 0 : i32
    %c0_i32_1 = arith.constant 0 : i32
    return %arg0, %c0_i32, %c0_i32_0 : i32, i32, i32
  }
  func.func @transform_1(%arg0: i32) -> (i32, i32) {
    %c0_i32 = arith.constant 0 : i32
    %c0_i32_0 = arith.constant 0 : i32
    %c0_i32_1 = arith.constant 0 : i32
    return %c0_i32, %c0_i32_0 : i32, i32
  }
  func.func @transform_2(%arg0: i32) -> (i32, i32) {
    %c0_i32 = arith.constant 0 : i32
    %c0_i32_0 = arith.constant 0 : i32
    %c0_i32_1 = arith.constant 0 : i32
    return %c0_i32, %c0_i32_0 : i32, i32
  }
  func.func @transform_3(%arg0: i32) -> (i32, i32) {
    %c0_i32 = arith.constant 0 : i32
    %c0_i32_0 = arith.constant 0 : i32
    %c0_i32_1 = arith.constant 0 : i32
    return %c0_i32, %c0_i32_0 : i32, i32
  }
  func.func @transform_4(%arg0: i32) -> (i32, i32) {
    %c0_i32 = arith.constant 0 : i32
    %c0_i32_0 = arith.constant 0 : i32
    %c0_i32_1 = arith.constant 0 : i32
    return %c0_i32, %c0_i32_0 : i32, i32
  }
  func.func @transform_5(%arg0: i32) -> (i32, i32) {
    %c0_i32 = arith.constant 0 : i32
    %c0_i32_0 = arith.constant 0 : i32
    %c0_i32_1 = arith.constant 0 : i32
    return %c0_i32, %c0_i32_0 : i32, i32
  }
  func.func @transform_6(%arg0: i32) -> (i32, i32) {
    %c0_i32 = arith.constant 0 : i32
    %c0_i32_0 = arith.constant 0 : i32
    %c0_i32_1 = arith.constant 0 : i32
    return %c0_i32, %c0_i32_0 : i32, i32
  }
  func.func @transform_7(%arg0: i32) -> (i32, i32) {
    %c0_i32 = arith.constant 0 : i32
    %c0_i32_0 = arith.constant 0 : i32
    %c0_i32_1 = arith.constant 0 : i32
    return %c0_i32, %c0_i32_0 : i32, i32
  }
  func.func @transform_8(%arg0: i32) -> (i32, i32) {
    %c0_i32 = arith.constant 0 : i32
    %c0_i32_0 = arith.constant 0 : i32
    %c0_i32_1 = arith.constant 0 : i32
    return %c0_i32, %c0_i32_0 : i32, i32
  }
  func.func @transform_9(%arg0: i32) -> (i32, i32) {
    %c0_i32 = arith.constant 0 : i32
    %c0_i32_0 = arith.constant 0 : i32
    %c0_i32_1 = arith.constant 0 : i32
    return %c0_i32, %c0_i32_0 : i32, i32
  }
  func.func @transform_10(%arg0: i32) -> (i32, i32) {
    %c0_i32 = arith.constant 0 : i32
    %c0_i32_0 = arith.constant 0 : i32
    %c0_i32_1 = arith.constant 0 : i32
    return %c0_i32, %c0_i32_0 : i32, i32
  }
  func.func @transform_11(%arg0: i32) -> (i32, i32, i32) {
    %c0_i32 = arith.constant 0 : i32
    %c0_i32_0 = arith.constant 0 : i32
    %c0_i32_1 = arith.constant 0 : i32
    return %arg0, %c0_i32, %c0_i32_0 : i32, i32, i32
  }
}

</mosaic_0001>

<llo_original>
// kernel: tpu_custom_call.1
$region0: #{tpu_custom_call.1}
  #allocation0 [shape = 'u32[]', space=smem, size = 0x4, offset = 0x4, fixed_abs, tag = 'smem constant byte address 0x4 - core index']
  #allocation1 [shape = 'u32[144,128]{1,0:T(1,128)}', space=vmem, size = 0x12000, scoped, tag = 'internal scratch']
  %s0 = inlined_call_operand.vmem [shape: f32[4,8,128], index: 0, kind: input, shape index: {}]
  %s1 = inlined_call_operand.vmem [shape: f32[8,128], index: 1, kind: input, shape index: {}]
  %s2 = inlined_call_operand.vmem [shape: f32[128,32], index: 2, kind: input, shape index: {}]
  %s3 = inlined_call_operand.vmem [shape: f32[1,32], index: 3, kind: input, shape index: {}]
  %s4 = inlined_call_operand.vmem [shape: f32[32,128], index: 4, kind: input, shape index: {}]
  %s5 = inlined_call_operand.vmem [shape: f32[1,128], index: 5, kind: input, shape index: {}]
  %s6 = inlined_call_operand.vmem [shape: f32[8,128], index: 6, kind: input, shape index: {}]
  %s7 = inlined_call_operand.vmem [shape: f32[2,8], index: 7, kind: input, shape index: {}]
  %s8 = inlined_call_operand.vmem [shape: f32[2,1], index: 8, kind: input, shape index: {}]
  %s9 = inlined_call_operand.vmem [shape: f32[8,2], index: 9, kind: input, shape index: {}]
  %s10 = inlined_call_operand.vmem [shape: f32[8,1], index: 10, kind: input, shape index: {}]
  %s11 = inlined_call_operand.hbm [shape: f32[4,8,128], index: 11, kind: output, shape index: {}]
  %s12 = sld [smem:[#allocation0]]
  $region54: #{tpu_custom_call.1} parent=0
    _
  %s14 = ssub.s32 1, %s12
  %s15 = scalar_select 0, %s14, %s12
  $region1: #{tpu_custom_call.1} parent=0
    #allocation2 [shape = 'u8[16384]{0}', space=vmem, size = 0x4000, scoped, tag = 'output window, operand 0, single buffered']
    #allocation3 [shape = 's32[1]{0}', space=sflag, size = 0x4, scoped, tag = 'scoped memory for tpu_custom_call.1']
    %16 = vsyncpa [#allocation3], 0
    // Predicated region
    $region2: #{tpu_custom_call.1} parent=1 // pred_check
      _
    $region3: #{tpu_custom_call.1} parent=1 // pred_check_branch
      %18 = sbr.rel (0) target = $region5
    $region4: #{tpu_custom_call.1} parent=1 // pred_region
      _
    $region5: #{tpu_custom_call.1} parent=1 // pred_fallthru
      _
    // Predicated region
    $region6: #{tpu_custom_call.1} parent=1 // pred_check
      _
    $region7: #{tpu_custom_call.1} parent=1 // pred_check_branch
      %20 = sbr.rel (0) target = $region9
    $region8: #{tpu_custom_call.1} parent=1 // pred_region
      _
    $region9: #{tpu_custom_call.1} parent=1 // pred_fallthru
      _
    // Predicated region
    $region10: #{tpu_custom_call.1} parent=1 // pred_check
      _
    $region11: #{tpu_custom_call.1} parent=1 // pred_check_branch
      %22 = sbr.rel (0) target = $region13
    $region12: #{tpu_custom_call.1} parent=1 // pred_region
      _
    $region13: #{tpu_custom_call.1} parent=1 // pred_fallthru
      _
    // Predicated region
    $region14: #{tpu_custom_call.1} parent=1 // pred_check
      _
    $region15: #{tpu_custom_call.1} parent=1 // pred_check_branch
      %24 = sbr.rel (0) target = $region17
    $region16: #{tpu_custom_call.1} parent=1 // pred_region
      _
    $region17: #{tpu_custom_call.1} parent=1 // pred_fallthru
      _
    // Predicated region
    $region18: #{tpu_custom_call.1} parent=1 // pred_check
      _
    $region19: #{tpu_custom_call.1} parent=1 // pred_check_branch
      %26 = sbr.rel (0) target = $region21
    $region20: #{tpu_custom_call.1} parent=1 // pred_region
      _
    $region21: #{tpu_custom_call.1} parent=1 // pred_fallthru
      _
    // Predicated region
    $region22: #{tpu_custom_call.1} parent=1 // pred_check
      _
    $region23: #{tpu_custom_call.1} parent=1 // pred_check_branch
      %28 = sbr.rel (0) target = $region25
    $region24: #{tpu_custom_call.1} parent=1 // pred_region
      _
    $region25: #{tpu_custom_call.1} parent=1 // pred_fallthru
      _
    // Predicated region
    $region26: #{tpu_custom_call.1} parent=1 // pred_check
      _
    $region27: #{tpu_custom_call.1} parent=1 // pred_check_branch
      %30 = sbr.rel (0) target = $region29
    $region28: #{tpu_custom_call.1} parent=1 // pred_region
      _
    $region29: #{tpu_custom_call.1} parent=1 // pred_fallthru
      _
    // Predicated region
    $region30: #{tpu_custom_call.1} parent=1 // pred_check
      _
    $region31: #{tpu_custom_call.1} parent=1 // pred_check_branch
      %32 = sbr.rel (0) target = $region33
    $region32: #{tpu_custom_call.1} parent=1 // pred_region
      _
    $region33: #{tpu_custom_call.1} parent=1 // pred_fallthru
      _
    // Predicated region
    $region34: #{tpu_custom_call.1} parent=1 // pred_check
      _
    $region35: #{tpu_custom_call.1} parent=1 // pred_check_branch
      %34 = sbr.rel (0) target = $region37
    $region36: #{tpu_custom_call.1} parent=1 // pred_region
      _
    $region37: #{tpu_custom_call.1} parent=1 // pred_fallthru
      _
    // Predicated region
    $region38: #{tpu_custom_call.1} parent=1 // pred_check
      _
    $region39: #{tpu_custom_call.1} parent=1 // pred_check_branch
      %36 = sbr.rel (0) target = $region41
    $region40: #{tpu_custom_call.1} parent=1 // pred_region
      _
    $region41: #{tpu_custom_call.1} parent=1 // pred_fallthru
      _
    // Predicated region
    $region42: #{tpu_custom_call.1} parent=1 // pred_check
      _
    $region43: #{tpu_custom_call.1} parent=1 // pred_check_branch
      %38 = sbr.rel (0) target = $region45
    $region44: #{tpu_custom_call.1} parent=1 // pred_region
      _
    $region45: #{tpu_custom_call.1} parent=1 // pred_fallthru
      _
    %v39 = vld [vmem:[%s0] sm:$0xff]
    %v40 = vld [vmem:[%s0 + $0x8] sm:$0xff]
    %v41 = vld [vmem:[%s0 + $0x10] sm:$0xff]
    %v42 = vld [vmem:[%s0 + $0x18] sm:$0xff]
    %v43 = vmul.f32 %v39, %v39
    %v44 = vmul.f32 %v40, %v40
    %v45 = vmul.f32 %v41, %v41
    %v46 = vmul.f32 %v42, %v42
    %47 = vadd.xlane.f32.xlu0 %v43
    %v48 = vpop.xlane.xlu0 %47
    %49 = vadd.xlane.f32.xlu0 %v44
    %v50 = vpop.xlane.xlu0 %49
    %51 = vadd.xlane.f32.xlu0 %v45
    %v52 = vpop.xlane.xlu0 %51
    %53 = vadd.xlane.f32.xlu0 %v46
    %v54 = vpop.xlane.xlu0 %53
    %v55 = vrot.slane %v48, 4
    %v56 = vadd.f32 %v48, %v55
    %v57 = vrot.slane %v56, 2
    %v58 = vadd.f32 %v56, %v57
    %v59 = vrot.slane %v58, 1
    %v60 = vadd.f32 %v58, %v59
    %v61 = vrot.slane %v50, 4
    %v62 = vadd.f32 %v50, %v61
    %v63 = vrot.slane %v62, 2
    %v64 = vadd.f32 %v62, %v63
    %v65 = vrot.slane %v64, 1
    %v66 = vadd.f32 %v64, %v65
    %v67 = vrot.slane %v52, 4
    %v68 = vadd.f32 %v52, %v67
    %v69 = vrot.slane %v68, 2
    %v70 = vadd.f32 %v68, %v69
    %v71 = vrot.slane %v70, 1
    %v72 = vadd.f32 %v70, %v71
    %v73 = vrot.slane %v54, 4
    %v74 = vadd.f32 %v54, %v73
    %v75 = vrot.slane %v74, 2
    %v76 = vadd.f32 %v74, %v75
    %v77 = vrot.slane %v76, 1
    %v78 = vadd.f32 %v76, %v77
    %v79 = vmul.f32 %v60, 0.0013020834
    %v80 = vmul.f32 %v66, 0.0013020834
    %v81 = vmul.f32 %v72, 0.0013020834
    %v82 = vmul.f32 %v78, 0.0013020834
    %v83 = vadd.f32 %v79, 1e-08
    %v84 = vadd.f32 %v80, 1e-08
    %v85 = vadd.f32 %v81, 1e-08
    %v86 = vadd.f32 %v82, 1e-08
    %v87 = vrsqrt.pop %v83
    %v88 = vrsqrt.pop %v84
    %v89 = vrsqrt.pop %v85
    %v90 = vrsqrt.pop %v86
    %v91 = vld [vmem:[%s1] sm:$0xff]
    %v92 = vmul.f32 %v91, %v39
    %v93 = vmul.f32 %v91, %v40
    %v94 = vmul.f32 %v91, %v41
    %v95 = vmul.f32 %v91, %v42
    %v96 = vmul.f32 %v92, %v87
    %v97 = vmul.f32 %v93, %v88
    %v98 = vmul.f32 %v94, %v89
    %v99 = vmul.f32 %v95, %v90
    %v100 = vld [vmem:[%s2] sm:$0xff]
    %v101 = vld [vmem:[%s2 + $0x8] sm:$0xff]
    %v102 = vld [vmem:[%s2 + $0x10] sm:$0xff]
    %v103 = vld [vmem:[%s2 + $0x18] sm:$0xff]
    %v104 = vld [vmem:[%s2 + $0x20] sm:$0xff]
    %v105 = vld [vmem:[%s2 + $0x28] sm:$0xff]
    %v106 = vld [vmem:[%s2 + $0x30] sm:$0xff]
    %v107 = vld [vmem:[%s2 + $0x38] sm:$0xff]
    %v108 = vld [vmem:[%s2 + $0x40] sm:$0xff]
    %v109 = vld [vmem:[%s2 + $0x48] sm:$0xff]
    %v110 = vld [vmem:[%s2 + $0x50] sm:$0xff]
    %v111 = vld [vmem:[%s2 + $0x58] sm:$0xff]
    %v112 = vld [vmem:[%s2 + $0x60] sm:$0xff]
    %v113 = vld [vmem:[%s2 + $0x68] sm:$0xff]
    %v114 = vld [vmem:[%s2 + $0x70] sm:$0xff]
    %v115 = vld [vmem:[%s2 + $0x78] sm:$0xff]
    %v116 = vld [vmem:[%s3] sm:$0x1]
    %v118 = vlaneseq
    %v119 = vshrl.u32 %v118, 7
    %v120 = vsub.s32 0, %v119
    %v121 = vrot.slane %v116, %v120
    %123 = vmatprep.subr.mxu0 0.0
    %124 = vmatpush1.msra.mxu0 %v100
    %125 = vmatprep.subr.mxu0 0.0
    %126 = vmatpush1.msra.mxu0 %v101
    %127 = vmatprep.subr.mxu0 0.0
    %128 = vmatpush1.msra.mxu0 %v102
    %129 = vmatprep.subr.mxu0 0.0
    %130 = vmatpush1.msra.mxu0 %v103
    %131 = vmatprep.subr.mxu0 0.0
    %132 = vmatpush1.msra.mxu0 %v104
    %133 = vmatprep.subr.mxu0 0.0
    %134 = vmatpush1.msra.mxu0 %v105
    %135 = vmatprep.subr.mxu0 0.0
    %136 = vmatpush1.msra.mxu0 %v106
    %137 = vmatprep.subr.mxu0 0.0
    %138 = vmatpush1.msra.mxu0 %v107
    %139 = vmatprep.subr.mxu0 0.0
    %140 = vmatpush1.msra.mxu0 %v108
    %141 = vmatprep.subr.mxu0 0.0
    %142 = vmatpush1.msra.mxu0 %v109
    %143 = vmatprep.subr.mxu0 0.0
    %144 = vmatpush1.msra.mxu0 %v110
    %145 = vmatprep.subr.mxu0 0.0
    %146 = vmatpush1.msra.mxu0 %v111
    %147 = vmatprep.subr.mxu0 0.0
    %148 = vmatpush1.msra.mxu0 %v112
    %149 = vmatprep.subr.mxu0 0.0
    %150 = vmatpush1.msra.mxu0 %v113
    %151 = vmatprep.subr.mxu0 0.0
    %152 = vmatpush1.msra.mxu0 %v114
    %153 = vmatprep.subr.mxu0 0.0
    %154 = vmatpush1.msra.mxu0 %v115
    %155 = vmatprep.subr.mxu0 0.0
    %156 = vmatpush1.msra.mxu0 0.0
    %157 = vmatprep.subr.mxu0 0.0
    %158 = vmatpush1.msra.mxu0 0.0
    %159 = vmatprep.subr.mxu0 0.0
    %160 = vmatpush1.msra.mxu0 0.0
    %161 = vmatprep.subr.mxu0 0.0
    %162 = vmatpush1.msra.mxu0 0.0
    %163 = vmatprep.subr.mxu0 0.0
    %164 = vmatpush1.msra.mxu0 0.0
    %165 = vmatprep.subr.mxu0 0.0
    %166 = vmatpush1.msra.mxu0 0.0
    %167 = vmatprep.subr.mxu0 0.0
    %168 = vmatpush1.msra.mxu0 0.0
    %169 = vmatprep.subr.mxu0 0.0
    %170 = vmatpush1.msra.mxu0 0.0
    %171 = vmatprep.subr.mxu0 0.0
    %172 = vmatpush1.msra.mxu0 0.0
    %173 = vmatprep.subr.mxu0 0.0
    %174 = vmatpush1.msra.mxu0 0.0
    %175 = vmatprep.subr.mxu0 0.0
    %176 = vmatpush1.msra.mxu0 0.0
    %177 = vmatprep.subr.mxu0 0.0
    %178 = vmatpush1.msra.mxu0 0.0
    %179 = vmatprep.subr.mxu0 0.0
    %180 = vmatpush1.msra.mxu0 0.0
    %181 = vmatprep.subr.mxu0 0.0
    %182 = vmatpush1.msra.mxu0 0.0
    %183 = vmatprep.subr.mxu0 0.0
    %184 = vmatpush1.msra.mxu0 0.0
    %185 = vmatprep.subr.mxu0 0.0
    %186 = vmatpush1.msra.mxu0 0.0
    %187 = vmatprep.mubr.f32.mxu0 0.0
    %188 = vmatmul.mubr.f32.gmra.mrb[0].mxu0 %v96
    %v189 = vpop.f32.mrb[0].mxu0
    %v190 = vadd.f32 %v121, %v189
    %v191 = vpop.f32.mrb[0].mxu0
    %192 = vmatprep.mubr.f32.mxu0 0.0
    %193 = vmatmul.mubr.f32.gmra.mrb[0].mxu0 %v97
    %v194 = vpop.f32.mrb[0].mxu0
    %v195 = vadd.f32 %v121, %v194
    %v196 = vpop.f32.mrb[0].mxu0
    %197 = vmatprep.mubr.f32.mxu0 0.0
    %198 = vmatmul.mubr.f32.gmra.mrb[0].mxu0 %v98
    %v199 = vpop.f32.mrb[0].mxu0
    %v200 = vadd.f32 %v121, %v199
    %v201 = vpop.f32.mrb[0].mxu0
    %202 = vmatprep.mubr.f32.mxu0 0.0
    %203 = vmatmul.mubr.f32.gmra.mrb[0].mxu0 %v99
    %v204 = vpop.f32.mrb[0].mxu0
    %v205 = vadd.f32 %v121, %v204
    %v206 = vpop.f32.mrb[0].mxu0
    %207 = vdwg.mxu0
    %v208 = vmax.f32 %v190, 0.0
    %v209 = vmax.f32 %v195, 0.0
    %v210 = vmax.f32 %v200, 0.0
    %v211 = vmax.f32 %v205, 0.0
    %v212 = vld [vmem:[%s4] sm:$0xff]
    %v213 = vld [vmem:[%s4 + $0x8] sm:$0xff]
    %v214 = vld [vmem:[%s4 + $0x10] sm:$0xff]
    %v215 = vld [vmem:[%s4 + $0x18] sm:$0xff]
    %v216 = vld [vmem:[%s5] sm:$0x1]
    %v218 = vlaneseq
    %v219 = vshrl.u32 %v218, 7
    %v220 = vsub.s32 0, %v219
    %v221 = vrot.slane %v216, %v220
    %vm223 = vcmask 261120
    %v225 = vsel %vm223, %v208, 0
    %v228 = vsel %vm223, %v209, 0
    %v231 = vsel %vm223, %v210, 0
    %v234 = vsel %vm223, %v211, 0
    %236 = vmatprep.subr.mxu0 0.0
    %237 = vmatpush1.msra.mxu0 %v212
    %238 = vmatprep.subr.mxu0 0.0
    %239 = vmatpush1.msra.mxu0 %v213
    %240 = vmatprep.subr.mxu0 0.0
    %241 = vmatpush1.msra.mxu0 %v214
    %242 = vmatprep.subr.mxu0 0.0
    %243 = vmatpush1.msra.mxu0 %v215
    %244 = vmatprep.subr.mxu0 0.0
    %245 = vmatpush1.msra.mxu0 0.0
    %246 = vmatprep.subr.mxu0 0.0
    %247 = vmatpush1.msra.mxu0 0.0
    %248 = vmatprep.subr.mxu0 0.0
    %249 = vmatpush1.msra.mxu0 0.0
    %250 = vmatprep.subr.mxu0 0.0
    %251 = vmatpush1.msra.mxu0 0.0
    %252 = vmatprep.subr.mxu0 0.0
    %253 = vmatpush1.msra.mxu0 0.0
    %254 = vmatprep.subr.mxu0 0.0
    %255 = vmatpush1.msra.mxu0 0.0
    %256 = vmatprep.subr.mxu0 0.0
    %257 = vmatpush1.msra.mxu0 0.0
    %258 = vmatprep.subr.mxu0 0.0
    %259 = vmatpush1.msra.mxu0 0.0
    %260 = vmatprep.subr.mxu0 0.0
    %261 = vmatpush1.msra.mxu0 0.0
    %262 = vmatprep.subr.mxu0 0.0
    %263 = vmatpush1.msra.mxu0 0.0
    %264 = vmatprep.subr.mxu0 0.0
    %265 = vmatpush1.msra.mxu0 0.0
    %266 = vmatprep.subr.mxu0 0.0
    %267 = vmatpush1.msra.mxu0 0.0
    %268 = vmatprep.subr.mxu0 0.0
    %269 = vmatpush1.msra.mxu0 0.0
    %270 = vmatprep.subr.mxu0 0.0
    %271 = vmatpush1.msra.mxu0 0.0
    %272 = vmatprep.subr.mxu0 0.0
    %273 = vmatpush1.msra.mxu0 0.0
    %274 = vmatprep.subr.mxu0 0.0
    %275 = vmatpush1.msra.mxu0 0.0
    %276 = vmatprep.subr.mxu0 0.0
    %277 = vmatpush1.msra.mxu0 0.0
    %278 = vmatprep.subr.mxu0 0.0
    %279 = vmatpush1.msra.mxu0 0.0
    %280 = vmatprep.subr.mxu0 0.0
    %281 = vmatpush1.msra.mxu0 0.0
    %282 = vmatprep.subr.mxu0 0.0
    %283 = vmatpush1.msra.mxu0 0.0
    %284 = vmatprep.subr.mxu0 0.0
    %285 = vmatpush1.msra.mxu0 0.0
    %286 = vmatprep.subr.mxu0 0.0
    %287 = vmatpush1.msra.mxu0 0.0
    %288 = vmatprep.subr.mxu0 0.0
    %289 = vmatpush1.msra.mxu0 0.0
    %290 = vmatprep.subr.mxu0 0.0
    %291 = vmatpush1.msra.mxu0 0.0
    %292 = vmatprep.subr.mxu0 0.0
    %293 = vmatpush1.msra.mxu0 0.0
    %294 = vmatprep.subr.mxu0 0.0
    %295 = vmatpush1.msra.mxu0 0.0
    %296 = vmatprep.subr.mxu0 0.0
    %297 = vmatpush1.msra.mxu0 0.0
    %298 = vmatprep.subr.mxu0 0.0
    %299 = vmatpush1.msra.mxu0 0.0
    %300 = vmatprep.mubr.f32.mxu0 0.0
    %301 = vmatmul.mubr.f32.gmra.mrb[0].mxu0 %v225
    %v302 = vpop.f32.mrb[0].mxu0
    %v303 = vadd.f32 %v221, %v302
    %v304 = vpop.f32.mrb[0].mxu0
    %305 = vmatprep.mubr.f32.mxu0 0.0
    %306 = vmatmul.mubr.f32.gmra.mrb[0].mxu0 %v228
    %v307 = vpop.f32.mrb[0].mxu0
    %v308 = vadd.f32 %v221, %v307
    %v309 = vpop.f32.mrb[0].mxu0
    %310 = vmatprep.mubr.f32.mxu0 0.0
    %311 = vmatmul.mubr.f32.gmra.mrb[0].mxu0 %v231
    %v312 = vpop.f32.mrb[0].mxu0
    %v313 = vadd.f32 %v221, %v312
    %v314 = vpop.f32.mrb[0].mxu0
    %315 = vmatprep.mubr.f32.mxu0 0.0
    %316 = vmatmul.mubr.f32.gmra.mrb[0].mxu0 %v234
    %v317 = vpop.f32.mrb[0].mxu0
    %v318 = vadd.f32 %v221, %v317
    %v319 = vpop.f32.mrb[0].mxu0
    %320 = vdwg.mxu0
    %v321 = vadd.f32 %v39, %v303
    %v322 = vadd.f32 %v40, %v308
    %v323 = vadd.f32 %v41, %v313
    %v324 = vadd.f32 %v42, %v318
    %v325 = vmul.f32 %v321, %v321
    %v326 = vmul.f32 %v322, %v322
    %v327 = vmul.f32 %v323, %v323
    %v328 = vmul.f32 %v324, %v324
    %329 = vadd.xlane.f32.xlu0 %v325
    %v330 = vpop.xlane.xlu0 %329
    %331 = vadd.xlane.f32.xlu0 %v326
    %v332 = vpop.xlane.xlu0 %331
    %333 = vadd.xlane.f32.xlu0 %v327
    %v334 = vpop.xlane.xlu0 %333
    %335 = vadd.xlane.f32.xlu0 %v328
    %v336 = vpop.xlane.xlu0 %335
    %v337 = vrot.slane %v330, 4
    %v338 = vadd.f32 %v330, %v337
    %v339 = vrot.slane %v338, 2
    %v340 = vadd.f32 %v338, %v339
    %v341 = vrot.slane %v340, 1
    %v342 = vadd.f32 %v340, %v341
    %v343 = vrot.slane %v332, 4
    %v344 = vadd.f32 %v332, %v343
    %v345 = vrot.slane %v344, 2
    %v346 = vadd.f32 %v344, %v345
    %v347 = vrot.slane %v346, 1
    %v348 = vadd.f32 %v346, %v347
    %v349 = vrot.slane %v334, 4
    %v350 = vadd.f32 %v334, %v349
    %v351 = vrot.slane %v350, 2
    %v352 = vadd.f32 %v350, %v351
    %v353 = vrot.slane %v352, 1
    %v354 = vadd.f32 %v352, %v353
    %v355 = vrot.slane %v336, 4
    %v356 = vadd.f32 %v336, %v355
    %v357 = vrot.slane %v356, 2
    %v358 = vadd.f32 %v356, %v357
    %v359 = vrot.slane %v358, 1
    %v360 = vadd.f32 %v358, %v359
    %v361 = vmul.f32 %v342, 0.0013020834
    %v362 = vmul.f32 %v348, 0.0013020834
    %v363 = vmul.f32 %v354, 0.0013020834
    %v364 = vmul.f32 %v360, 0.0013020834
    %v365 = vadd.f32 %v361, 1e-08
    %v366 = vadd.f32 %v362, 1e-08
    %v367 = vadd.f32 %v363, 1e-08
    %v368 = vadd.f32 %v364, 1e-08
    %v369 = vrsqrt.pop %v365
    %v370 = vrsqrt.pop %v366
    %v371 = vrsqrt.pop %v367
    %v372 = vrsqrt.pop %v368
    %v373 = vld [vmem:[%s6] sm:$0xff]
    %v374 = vmul.f32 %v373, %v321
    %v375 = vmul.f32 %v373, %v322
    %v376 = vmul.f32 %v373, %v323
    %v377 = vmul.f32 %v373, %v324
    %v378 = vmul.f32 %v374, %v369
    %v379 = vmul.f32 %v375, %v370
    %v380 = vmul.f32 %v376, %v371
    %v381 = vmul.f32 %v377, %v372
    %v382 = vld [vmem:[%s7] sm:$0x3]
    %v383 = vld [vmem:[%s9] sm:$0xff]
    %v384 = vlaneseq
    %v385 = vshrl.u32 %v384, 7
    %v386 = vsub.s32 0, %v385
    %v387 = vrot.slane %v382, %v386
    %389 = vbcast.lane.b32.xlu0 %v387, 256
    %v390 = vpop.permute.xlu0 %389
    %v391 = vlaneseq
    %v392 = vshrl.u32 %v391, 7
    %v393 = vsub.s32 1, %v392
    %v394 = vrot.slane %v382, %v393
    %396 = vbcast.lane.b32.xlu0 %v394, 256
    %v397 = vpop.permute.xlu0 %396
    %v398 = vmul.f32 %v390, %v378
    %v399 = vmul.f32 %v397, %v378
    %v400 = vmul.f32 %v390, %v379
    %v401 = vmul.f32 %v397, %v379
    %v402 = vmul.f32 %v390, %v380
    %v403 = vmul.f32 %v397, %v380
    %v404 = vmul.f32 %v390, %v381
    %v405 = vmul.f32 %v397, %v381
    %v406 = vrot.slane %v398, 4
    %v407 = vadd.f32 %v398, %v406
    %v408 = vrot.slane %v407, 2
    %v409 = vadd.f32 %v407, %v408
    %v410 = vrot.slane %v409, 1
    %v411 = vadd.f32 %v409, %v410
    %v412 = vrot.slane %v399, 4
    %v413 = vadd.f32 %v399, %v412
    %v414 = vrot.slane %v413, 2
    %v415 = vadd.f32 %v413, %v414
    %v416 = vrot.slane %v415, 1
    %v417 = vadd.f32 %v415, %v416
    %v418 = vrot.slane %v400, 4
    %v419 = vadd.f32 %v400, %v418
    %v420 = vrot.slane %v419, 2
    %v421 = vadd.f32 %v419, %v420
    %v422 = vrot.slane %v421, 1
    %v423 = vadd.f32 %v421, %v422
    %v424 = vrot.slane %v401, 4
    %v425 = vadd.f32 %v401, %v424
    %v426 = vrot.slane %v425, 2
    %v427 = vadd.f32 %v425, %v426
    %v428 = vrot.slane %v427, 1
    %v429 = vadd.f32 %v427, %v428
    %v430 = vrot.slane %v402, 4
    %v431 = vadd.f32 %v402, %v430
    %v432 = vrot.slane %v431, 2
    %v433 = vadd.f32 %v431, %v432
    %v434 = vrot.slane %v433, 1
    %v435 = vadd.f32 %v433, %v434
    %v436 = vrot.slane %v403, 4
    %v437 = vadd.f32 %v403, %v436
    %v438 = vrot.slane %v437, 2
    %v439 = vadd.f32 %v437, %v438
    %v440 = vrot.slane %v439, 1
    %v441 = vadd.f32 %v439, %v440
    %v442 = vrot.slane %v404, 4
    %v443 = vadd.f32 %v404, %v442
    %v444 = vrot.slane %v443, 2
    %v445 = vadd.f32 %v443, %v444
    %v446 = vrot.slane %v445, 1
    %v447 = vadd.f32 %v445, %v446
    %v448 = vrot.slane %v405, 4
    %v449 = vadd.f32 %v405, %v448
    %v450 = vrot.slane %v449, 2
    %v451 = vadd.f32 %v449, %v450
    %v452 = vrot.slane %v451, 1
    %v453 = vadd.f32 %v451, %v452
    %v454 = vld [vmem:[%s8] sm:$0x3]
    %456 = vset.pattern.permute.xlu0 0
    %457 = vperm.xlu0 %456, %v454
    %v458 = vpop.permute.xlu0 %457
    %v459 = vrot.slane %v458, 1
    %v462 = vadd.f32 %v411, %v458
    %v463 = vadd.f32 %v417, %v459
    %v464 = vadd.f32 %v423, %v458
    %v465 = vadd.f32 %v429, %v459
    %v466 = vadd.f32 %v435, %v458
    %v467 = vadd.f32 %v441, %v459
    %v468 = vadd.f32 %v447, %v458
    %v469 = vadd.f32 %v453, %v459
    %v470 = vmax.f32 %v462, 0.0
    %v471 = vmax.f32 %v463, 0.0
    %v472 = vmax.f32 %v464, 0.0
    %v473 = vmax.f32 %v465, 0.0
    %v474 = vmax.f32 %v466, 0.0
    %v475 = vmax.f32 %v467, 0.0
    %v476 = vmax.f32 %v468, 0.0
    %v477 = vmax.f32 %v469, 0.0
    %v478 = vlaneseq
    %v479 = vshrl.u32 %v478, 7
    %v480 = vsub.s32 0, %v479
    %v481 = vrot.slane %v383, %v480
    %483 = vbcast.lane.b32.xlu0 %v481, 256
    %v484 = vpop.permute.xlu0 %483
    %v485 = vlaneseq
    %v486 = vshrl.u32 %v485, 7
    %v487 = vsub.s32 1, %v486
    %v488 = vrot.slane %v383, %v487
    %490 = vbcast.lane.b32.xlu0 %v488, 256
    %v491 = vpop.permute.xlu0 %490
    %v492 = vlaneseq
    %v493 = vshrl.u32 %v492, 7
    %v494 = vsub.s32 2, %v493
    %v495 = vrot.slane %v383, %v494
    %497 = vbcast.lane.b32.xlu0 %v495, 256
    %v498 = vpop.permute.xlu0 %497
    %v499 = vlaneseq
    %v500 = vshrl.u32 %v499, 7
    %v501 = vsub.s32 3, %v500
    %v502 = vrot.slane %v383, %v501
    %504 = vbcast.lane.b32.xlu0 %v502, 256
    %v505 = vpop.permute.xlu0 %504
    %v506 = vlaneseq
    %v507 = vshrl.u32 %v506, 7
    %v508 = vsub.s32 4, %v507
    %v509 = vrot.slane %v383, %v508
    %511 = vbcast.lane.b32.xlu0 %v509, 256
    %v512 = vpop.permute.xlu0 %511
    %v513 = vlaneseq
    %v514 = vshrl.u32 %v513, 7
    %v515 = vsub.s32 5, %v514
    %v516 = vrot.slane %v383, %v515
    %518 = vbcast.lane.b32.xlu0 %v516, 256
    %v519 = vpop.permute.xlu0 %518
    %v520 = vlaneseq
    %v521 = vshrl.u32 %v520, 7
    %v522 = vsub.s32 6, %v521
    %v523 = vrot.slane %v383, %v522
    %525 = vbcast.lane.b32.xlu0 %v523, 256
    %v526 = vpop.permute.xlu0 %525
    %v527 = vlaneseq
    %v528 = vshrl.u32 %v527, 7
    %v529 = vsub.s32 7, %v528
    %v530 = vrot.slane %v383, %v529
    %532 = vbcast.lane.b32.xlu0 %v530, 256
    %v533 = vpop.permute.xlu0 %532
    %v542 = vrot.slane %v471, 7
    %vm543 = vcmask 1041409
    %v544 = vsel %vm543, %v542, %v470
    %v545 = vrot.slane %v473, 7
    %v546 = vsel %vm543, %v545, %v472
    %v547 = vrot.slane %v475, 7
    %v548 = vsel %vm543, %v547, %v474
    %v549 = vrot.slane %v477, 7
    %v550 = vsel %vm543, %v549, %v476
    %v555 = vmul.f32 %v484, %v544
    %v556 = vmul.f32 %v491, %v544
    %v557 = vmul.f32 %v498, %v544
    %v558 = vmul.f32 %v505, %v544
    %v559 = vmul.f32 %v512, %v544
    %v560 = vmul.f32 %v519, %v544
    %v561 = vmul.f32 %v526, %v544
    %v562 = vmul.f32 %v533, %v544
    %v563 = vmul.f32 %v484, %v546
    %v564 = vmul.f32 %v491, %v546
    %v565 = vmul.f32 %v498, %v546
    %v566 = vmul.f32 %v505, %v546
    %v567 = vmul.f32 %v512, %v546
    %v568 = vmul.f32 %v519, %v546
    %v569 = vmul.f32 %v526, %v546
    %v570 = vmul.f32 %v533, %v546
    %v571 = vmul.f32 %v484, %v548
    %v572 = vmul.f32 %v491, %v548
    %v573 = vmul.f32 %v498, %v548
    %v574 = vmul.f32 %v505, %v548
    %v575 = vmul.f32 %v512, %v548
    %v576 = vmul.f32 %v519, %v548
    %v577 = vmul.f32 %v526, %v548
    %v578 = vmul.f32 %v533, %v548
    %v579 = vmul.f32 %v484, %v550
    %v580 = vmul.f32 %v491, %v550
    %v581 = vmul.f32 %v498, %v550
    %v582 = vmul.f32 %v505, %v550
    %v583 = vmul.f32 %v512, %v550
    %v584 = vmul.f32 %v519, %v550
    %v585 = vmul.f32 %v526, %v550
    %v586 = vmul.f32 %v533, %v550
    %vm587 = vcmask 1041408
    %v588 = vsel %vm587, %v555, 0.0
    %v589 = vrot.slane %v588, 4
    %v590 = vadd.f32 %v588, %v589
    %v591 = vrot.slane %v590, 2
    %v592 = vadd.f32 %v590, %v591
    %v593 = vrot.slane %v592, 1
    %v594 = vadd.f32 %v592, %v593
    %v595 = vsel %vm587, %v556, 0.0
    %v596 = vrot.slane %v595, 4
    %v597 = vadd.f32 %v595, %v596
    %v598 = vrot.slane %v597, 2
    %v599 = vadd.f32 %v597, %v598
    %v600 = vrot.slane %v599, 1
    %v601 = vadd.f32 %v599, %v600
    %v602 = vsel %vm587, %v557, 0.0
    %v603 = vrot.slane %v602, 4
    %v604 = vadd.f32 %v602, %v603
    %v605 = vrot.slane %v604, 2
    %v606 = vadd.f32 %v604, %v605
    %v607 = vrot.slane %v606, 1
    %v608 = vadd.f32 %v606, %v607
    %v609 = vsel %vm587, %v558, 0.0
    %v610 = vrot.slane %v609, 4
    %v611 = vadd.f32 %v609, %v610
    %v612 = vrot.slane %v611, 2
    %v613 = vadd.f32 %v611, %v612
    %v614 = vrot.slane %v613, 1
    %v615 = vadd.f32 %v613, %v614
    %v616 = vsel %vm587, %v559, 0.0
    %v617 = vrot.slane %v616, 4
    %v618 = vadd.f32 %v616, %v617
    %v619 = vrot.slane %v618, 2
    %v620 = vadd.f32 %v618, %v619
    %v621 = vrot.slane %v620, 1
    %v622 = vadd.f32 %v620, %v621
    %v623 = vsel %vm587, %v560, 0.0
    %v624 = vrot.slane %v623, 4
    %v625 = vadd.f32 %v623, %v624
    %v626 = vrot.slane %v625, 2
    %v627 = vadd.f32 %v625, %v626
    %v628 = vrot.slane %v627, 1
    %v629 = vadd.f32 %v627, %v628
    %v630 = vsel %vm587, %v561, 0.0
    %v631 = vrot.slane %v630, 4
    %v632 = vadd.f32 %v630, %v631
    %v633 = vrot.slane %v632, 2
    %v634 = vadd.f32 %v632, %v633
    %v635 = vrot.slane %v634, 1
    %v636 = vadd.f32 %v634, %v635
    %v637 = vsel %vm587, %v562, 0.0
    %v638 = vrot.slane %v637, 4
    %v639 = vadd.f32 %v637, %v638
    %v640 = vrot.slane %v639, 2
    %v641 = vadd.f32 %v639, %v640
    %v642 = vrot.slane %v641, 1
    %v643 = vadd.f32 %v641, %v642
    %v644 = vsel %vm587, %v563, 0.0
    %v645 = vrot.slane %v644, 4
    %v646 = vadd.f32 %v644, %v645
    %v647 = vrot.slane %v646, 2
    %v648 = vadd.f32 %v646, %v647
    %v649 = vrot.slane %v648, 1
    %v650 = vadd.f32 %v648, %v649
    %v651 = vsel %vm587, %v564, 0.0
    %v652 = vrot.slane %v651, 4
    %v653 = vadd.f32 %v651, %v652
    %v654 = vrot.slane %v653, 2
    %v655 = vadd.f32 %v653, %v654
    %v656 = vrot.slane %v655, 1
    %v657 = vadd.f32 %v655, %v656
    %v658 = vsel %vm587, %v565, 0.0
    %v659 = vrot.slane %v658, 4
    %v660 = vadd.f32 %v658, %v659
    %v661 = vrot.slane %v660, 2
    %v662 = vadd.f32 %v660, %v661
    %v663 = vrot.slane %v662, 1
    %v664 = vadd.f32 %v662, %v663
    %v665 = vsel %vm587, %v566, 0.0
    %v666 = vrot.slane %v665, 4
    %v667 = vadd.f32 %v665, %v666
    %v668 = vrot.slane %v667, 2
    %v669 = vadd.f32 %v667, %v668
    %v670 = vrot.slane %v669, 1
    %v671 = vadd.f32 %v669, %v670
    %v672 = vsel %vm587, %v567, 0.0
    %v673 = vrot.slane %v672, 4
    %v674 = vadd.f32 %v672, %v673
    %v675 = vrot.slane %v674, 2
    %v676 = vadd.f32 %v674, %v675
    %v677 = vrot.slane %v676, 1
    %v678 = vadd.f32 %v676, %v677
    %v679 = vsel %vm587, %v568, 0.0
    %v680 = vrot.slane %v679, 4
    %v681 = vadd.f32 %v679, %v680
    %v682 = vrot.slane %v681, 2
    %v683 = vadd.f32 %v681, %v682
    %v684 = vrot.slane %v683, 1
    %v685 = vadd.f32 %v683, %v684
    %v686 = vsel %vm587, %v569, 0.0
    %v687 = vrot.slane %v686, 4
    %v688 = vadd.f32 %v686, %v687
    %v689 = vrot.slane %v688, 2
    %v690 = vadd.f32 %v688, %v689
    %v691 = vrot.slane %v690, 1
    %v692 = vadd.f32 %v690, %v691
    %v693 = vsel %vm587, %v570, 0.0
    %v694 = vrot.slane %v693, 4
    %v695 = vadd.f32 %v693, %v694
    %v696 = vrot.slane %v695, 2
    %v697 = vadd.f32 %v695, %v696
    %v698 = vrot.slane %v697, 1
    %v699 = vadd.f32 %v697, %v698
    %v700 = vsel %vm587, %v571, 0.0
    %v701 = vrot.slane %v700, 4
    %v702 = vadd.f32 %v700, %v701
    %v703 = vrot.slane %v702, 2
    %v704 = vadd.f32 %v702, %v703
    %v705 = vrot.slane %v704, 1
    %v706 = vadd.f32 %v704, %v705
    %v707 = vsel %vm587, %v572, 0.0
    %v708 = vrot.slane %v707, 4
    %v709 = vadd.f32 %v707, %v708
    %v710 = vrot.slane %v709, 2
    %v711 = vadd.f32 %v709, %v710
    %v712 = vrot.slane %v711, 1
    %v713 = vadd.f32 %v711, %v712
    %v714 = vsel %vm587, %v573, 0.0
    %v715 = vrot.slane %v714, 4
    %v716 = vadd.f32 %v714, %v715
    %v717 = vrot.slane %v716, 2
    %v718 = vadd.f32 %v716, %v717
    %v719 = vrot.slane %v718, 1
    %v720 = vadd.f32 %v718, %v719
    %v721 = vsel %vm587, %v574, 0.0
    %v722 = vrot.slane %v721, 4
    %v723 = vadd.f32 %v721, %v722
    %v724 = vrot.slane %v723, 2
    %v725 = vadd.f32 %v723, %v724
    %v726 = vrot.slane %v725, 1
    %v727 = vadd.f32 %v725, %v726
    %v728 = vsel %vm587, %v575, 0.0
    %v729 = vrot.slane %v728, 4
    %v730 = vadd.f32 %v728, %v729
    %v731 = vrot.slane %v730, 2
    %v732 = vadd.f32 %v730, %v731
    %v733 = vrot.slane %v732, 1
    %v734 = vadd.f32 %v732, %v733
    %v735 = vsel %vm587, %v576, 0.0
    %v736 = vrot.slane %v735, 4
    %v737 = vadd.f32 %v735, %v736
    %v738 = vrot.slane %v737, 2
    %v739 = vadd.f32 %v737, %v738
    %v740 = vrot.slane %v739, 1
    %v741 = vadd.f32 %v739, %v740
    %v742 = vsel %vm587, %v577, 0.0
    %v743 = vrot.slane %v742, 4
    %v744 = vadd.f32 %v742, %v743
    %v745 = vrot.slane %v744, 2
    %v746 = vadd.f32 %v744, %v745
    %v747 = vrot.slane %v746, 1
    %v748 = vadd.f32 %v746, %v747
    %v749 = vsel %vm587, %v578, 0.0
    %v750 = vrot.slane %v749, 4
    %v751 = vadd.f32 %v749, %v750
    %v752 = vrot.slane %v751, 2
    %v753 = vadd.f32 %v751, %v752
    %v754 = vrot.slane %v753, 1
    %v755 = vadd.f32 %v753, %v754
    %v756 = vsel %vm587, %v579, 0.0
    %v757 = vrot.slane %v756, 4
    %v758 = vadd.f32 %v756, %v757
    %v759 = vrot.slane %v758, 2
    %v760 = vadd.f32 %v758, %v759
    %v761 = vrot.slane %v760, 1
    %v762 = vadd.f32 %v760, %v761
    %v763 = vsel %vm587, %v580, 0.0
    %v764 = vrot.slane %v763, 4
    %v765 = vadd.f32 %v763, %v764
    %v766 = vrot.slane %v765, 2
    %v767 = vadd.f32 %v765, %v766
    %v768 = vrot.slane %v767, 1
    %v769 = vadd.f32 %v767, %v768
    %v770 = vsel %vm587, %v581, 0.0
    %v771 = vrot.slane %v770, 4
    %v772 = vadd.f32 %v770, %v771
    %v773 = vrot.slane %v772, 2
    %v774 = vadd.f32 %v772, %v773
    %v775 = vrot.slane %v774, 1
    %v776 = vadd.f32 %v774, %v775
    %v777 = vsel %vm587, %v582, 0.0
    %v778 = vrot.slane %v777, 4
    %v779 = vadd.f32 %v777, %v778
    %v780 = vrot.slane %v779, 2
    %v781 = vadd.f32 %v779, %v780
    %v782 = vrot.slane %v781, 1
    %v783 = vadd.f32 %v781, %v782
    %v784 = vsel %vm587, %v583, 0.0
    %v785 = vrot.slane %v784, 4
    %v786 = vadd.f32 %v784, %v785
    %v787 = vrot.slane %v786, 2
    %v788 = vadd.f32 %v786, %v787
    %v789 = vrot.slane %v788, 1
    %v790 = vadd.f32 %v788, %v789
    %v791 = vsel %vm587, %v584, 0.0
    %v792 = vrot.slane %v791, 4
    %v793 = vadd.f32 %v791, %v792
    %v794 = vrot.slane %v793, 2
    %v795 = vadd.f32 %v793, %v794
    %v796 = vrot.slane %v795, 1
    %v797 = vadd.f32 %v795, %v796
    %v798 = vsel %vm587, %v585, 0.0
    %v799 = vrot.slane %v798, 4
    %v800 = vadd.f32 %v798, %v799
    %v801 = vrot.slane %v800, 2
    %v802 = vadd.f32 %v800, %v801
    %v803 = vrot.slane %v802, 1
    %v804 = vadd.f32 %v802, %v803
    %v805 = vsel %vm587, %v586, 0.0
    %v806 = vrot.slane %v805, 4
    %v807 = vadd.f32 %v805, %v806
    %v808 = vrot.slane %v807, 2
    %v809 = vadd.f32 %v807, %v808
    %v810 = vrot.slane %v809, 1
    %v811 = vadd.f32 %v809, %v810
    %v812 = vld [vmem:[%s10] sm:$0xff]
    %814 = vset.pattern.permute.xlu0 0
    %815 = vperm.xlu0 %814, %v812
    %v816 = vpop.permute.xlu0 %815
    %v817 = vrot.slane %v816, 1
    %v818 = vrot.slane %v816, 2
    %v819 = vrot.slane %v816, 3
    %v820 = vrot.slane %v816, 4
    %v821 = vrot.slane %v816, 5
    %v822 = vrot.slane %v816, 6
    %v823 = vrot.slane %v816, 7
    %v832 = vadd.f32 %v594, %v816
    %v833 = vadd.f32 %v601, %v817
    %v834 = vadd.f32 %v608, %v818
    %v835 = vadd.f32 %v615, %v819
    %v836 = vadd.f32 %v622, %v820
    %v837 = vadd.f32 %v629, %v821
    %v838 = vadd.f32 %v636, %v822
    %v839 = vadd.f32 %v643, %v823
    %v840 = vadd.f32 %v650, %v816
    %v841 = vadd.f32 %v657, %v817
    %v842 = vadd.f32 %v664, %v818
    %v843 = vadd.f32 %v671, %v819
    %v844 = vadd.f32 %v678, %v820
    %v845 = vadd.f32 %v685, %v821
    %v846 = vadd.f32 %v692, %v822
    %v847 = vadd.f32 %v699, %v823
    %v848 = vadd.f32 %v706, %v816
    %v849 = vadd.f32 %v713, %v817
    %v850 = vadd.f32 %v720, %v818
    %v851 = vadd.f32 %v727, %v819
    %v852 = vadd.f32 %v734, %v820
    %v853 = vadd.f32 %v741, %v821
    %v854 = vadd.f32 %v748, %v822
    %v855 = vadd.f32 %v755, %v823
    %v856 = vadd.f32 %v762, %v816
    %v857 = vadd.f32 %v769, %v817
    %v858 = vadd.f32 %v776, %v818
    %v859 = vadd.f32 %v783, %v819
    %v860 = vadd.f32 %v790, %v820
    %v861 = vadd.f32 %v797, %v821
    %v862 = vadd.f32 %v804, %v822
    %v863 = vadd.f32 %v811, %v823
    %v896 = vrot.slane %v833, 7
    %v897 = vsel %vm543, %v896, %v832
    %v898 = vrot.slane %v834, 6
    %vm899 = vcmask 1042434
    %v900 = vsel %vm899, %v898, %v897
    %v901 = vrot.slane %v835, 5
    %vm902 = vcmask 1043459
    %v903 = vsel %vm902, %v901, %v900
    %v904 = vrot.slane %v836, 4
    %vm905 = vcmask 1044484
    %v906 = vsel %vm905, %v904, %v903
    %v907 = vrot.slane %v837, 3
    %vm908 = vcmask 1045509
    %v909 = vsel %vm908, %v907, %v906
    %v910 = vrot.slane %v838, 2
    %vm911 = vcmask 1046534
    %v912 = vsel %vm911, %v910, %v909
    %v913 = vrot.slane %v839, 1
    %vm914 = vcmask 1047559
    %v915 = vsel %vm914, %v913, %v912
    %v916 = vrot.slane %v841, 7
    %v917 = vsel %vm543, %v916, %v840
    %v918 = vrot.slane %v842, 6
    %v919 = vsel %vm899, %v918, %v917
    %v920 = vrot.slane %v843, 5
    %v921 = vsel %vm902, %v920, %v919
    %v922 = vrot.slane %v844, 4
    %v923 = vsel %vm905, %v922, %v921
    %v924 = vrot.slane %v845, 3
    %v925 = vsel %vm908, %v924, %v923
    %v926 = vrot.slane %v846, 2
    %v927 = vsel %vm911, %v926, %v925
    %v928 = vrot.slane %v847, 1
    %v929 = vsel %vm914, %v928, %v927
    %v930 = vrot.slane %v849, 7
    %v931 = vsel %vm543, %v930, %v848
    %v932 = vrot.slane %v850, 6
    %v933 = vsel %vm899, %v932, %v931
    %v934 = vrot.slane %v851, 5
    %v935 = vsel %vm902, %v934, %v933
    %v936 = vrot.slane %v852, 4
    %v937 = vsel %vm905, %v936, %v935
    %v938 = vrot.slane %v853, 3
    %v939 = vsel %vm908, %v938, %v937
    %v940 = vrot.slane %v854, 2
    %v941 = vsel %vm911, %v940, %v939
    %v942 = vrot.slane %v855, 1
    %v943 = vsel %vm914, %v942, %v941
    %v944 = vrot.slane %v857, 7
    %v945 = vsel %vm543, %v944, %v856
    %v946 = vrot.slane %v858, 6
    %v947 = vsel %vm899, %v946, %v945
    %v948 = vrot.slane %v859, 5
    %v949 = vsel %vm902, %v948, %v947
    %v950 = vrot.slane %v860, 4
    %v951 = vsel %vm905, %v950, %v949
    %v952 = vrot.slane %v861, 3
    %v953 = vsel %vm908, %v952, %v951
    %v954 = vrot.slane %v862, 2
    %v955 = vsel %vm911, %v954, %v953
    %v956 = vrot.slane %v863, 1
    %v957 = vsel %vm914, %v956, %v955
    %v962 = vadd.f32 %v321, %v915
    %v963 = vadd.f32 %v322, %v929
    %v964 = vadd.f32 %v323, %v943
    %v965 = vadd.f32 %v324, %v957
    %v966 = vlaneseq
    %v967 = vand.u32 %v966, 127
    %vm968 = vcmp.lt.s32.totalorder %v967, 96
    %v969 = vsel %vm968, %v962, 0.0
    %v970 = vsel %vm968, %v963, 0.0
    %v971 = vsel %vm968, %v964, 0.0
    %v972 = vsel %vm968, %v965, 0.0
    %973 = vst [vmem:[#allocation2] sm:$0xff] %v969
    %974 = vst [vmem:[#allocation2 + $0x8] sm:$0xff] %v970
    %975 = vst [vmem:[#allocation2 + $0x10] sm:$0xff] %v971
    %976 = vst [vmem:[#allocation2 + $0x18] sm:$0xff] %v972
    // Predicated region
    $region46: #{tpu_custom_call.1} parent=1 // pred_check
      _
    $region47: #{tpu_custom_call.1} parent=1 // pred_check_branch
      %978 = sbr.rel (0) target = $region49
    $region48: #{tpu_custom_call.1} parent=1 // pred_region
      %s980 = ssub.s32 512, 512
      %981 = vsyncadd [#allocation3], %s980
      %s982 = sshll.u32 [#allocation2], 4
      %s983 = int_to_ptr.vmem [resolvable:$true] %s982
      %988 = dma.vmem_to_hbm [thread:$0]  %s983, 512, %s11, [#allocation3], 128, 128, 8
    $region49: #{tpu_custom_call.1} parent=1 // pred_fallthru
      _
    // Predicated region
    $region50: #{tpu_custom_call.1} parent=1 // pred_check
      _
    $region51: #{tpu_custom_call.1} parent=1 // pred_check_branch
      %990 = sbr.rel (0) target = $region53
    $region52: #{tpu_custom_call.1} parent=1 // pred_region
      %991 = dma.done [#allocation3], 512
    $region53: #{tpu_custom_call.1} parent=1 // pred_fallthru
      _
    %992 = vsyncpa [#allocation3], 1

</llo_original>
